<compile_context>
chip_gen: v6e
topology: v6e:2x2x1
jax: 0.10.0
libtpu: 0.0.40
codegen_flags: <defaults>
</compile_context>

<pallas_src>
import functools

import numpy as np
import jax
import jax.numpy as jnp
from jax.experimental import pallas as pl
from jax.experimental.pallas import tpu as pltpu


LANES = 128
MIN_CAPACITY = 8 * LANES          # minimum (8, 128) tile
MAX_BLOCK_ROWS = 512              # 512*128*4 B = 256 KiB per block buffer


def _next_pow2(n: int) -> int:
    return 1 if n <= 1 else 1 << (int(n) - 1).bit_length()


def _bucket_capacity(n: int) -> int:
    """History-buffer capacity bucket (multiple of 8*128, power of two)."""
    return max(MIN_CAPACITY, _next_pow2(n))


def _bucket_pad(n: int) -> int:
    """Padding bucket for the small per-step incoming-edge arrays."""
    return max(LANES, _next_pow2(n))


# ---------------------------------------------------------------------------
# Pallas kernel: one tiled pass over the (R, 128) weight-capacity buffer.
#   out = discount * w                    for flat index < n_old
#   out[n_old-2 : n_old] = |out[...]|     if correction
#   out = 0                               for flat index >= n_old (dead slots)
# ---------------------------------------------------------------------------
def _discount_kernel(nold_ref, w_ref, out_ref, *, discount, correction,
                     block_rows):
    n_old = nold_ref[0]                                   # SMEM scalar
    base = pl.program_id(0) * (block_rows * LANES)
    row = jax.lax.broadcasted_iota(jnp.int32, (block_rows, LANES), 0)
    col = jax.lax.broadcasted_iota(jnp.int32, (block_rows, LANES), 1)
    idx = base + row * LANES + col                        # global flat index

    disc = w_ref[...] * jnp.float32(discount)
    if correction:
        last2 = (idx == n_old - 1) | (idx == n_old - 2)
        disc = jnp.where(last2, jnp.abs(disc), disc)
    out_ref[...] = jnp.where(idx < n_old, disc, jnp.float32(0.0))


@functools.lru_cache(maxsize=None)
def _build_discount_call(rows: int, discount: float, correction: bool):
    """Build (and cache) the pallas_call for a given capacity bucket."""
    block_rows = min(rows, MAX_BLOCK_ROWS)                # rows is a power of 2
    kernel = functools.partial(_discount_kernel, discount=discount,
                               correction=correction, block_rows=block_rows)
    grid_spec = pltpu.PrefetchScalarGridSpec(
        num_scalar_prefetch=1,                            # n_old -> SMEM
        grid=(rows // block_rows,),
        in_specs=[pl.BlockSpec((block_rows, LANES), lambda i, n: (i, 0))],
        out_specs=pl.BlockSpec((block_rows, LANES), lambda i, n: (i, 0)),
    )
    return pl.pallas_call(
        kernel,
        out_shape=jax.ShapeDtypeStruct((rows, LANES), jnp.float32),
        grid_spec=grid_spec,
        compiler_params=pltpu.CompilerParams(
            dimension_semantics=("parallel",)),
    )


# ---------------------------------------------------------------------------
# Device-side update step (jitted once per capacity-bucket combination).
# Pallas does the elementwise hot path; the dynamic compaction is expressed as
# cumsum + scatter-with-drop into a fixed-capacity buffer (plain jnp).
# ---------------------------------------------------------------------------
@functools.partial(jax.jit,
                   static_argnames=("new_cap", "discount", "correction"))
def _update_step(w_dev, idx_dev, new_w_pad, new_idx_pad, n_old, n_new,
                 new_cap, discount, correction):
    rows_old = w_dev.shape[0]
    cap_old = rows_old * LANES
    new_pad = new_w_pad.shape[0]

    n_old = jnp.asarray(n_old, jnp.int32)
    n_new = jnp.asarray(n_new, jnp.int32)

    # --- Pallas: discount + abs-correction + dead-capacity masking ----------
    disc = _build_discount_call(rows_old, float(discount), bool(correction))(
        n_old.reshape((1,)), w_dev)
    disc_flat = disc.reshape(cap_old)

    # cutoff = weight > new_w[0] * 1e-14   (no mask outputs needed from kernel)
    thresh = new_w_pad[0] * jnp.float32(1e-14)

    iota_old = jnp.arange(cap_old, dtype=jnp.int32)
    iota_new = jnp.arange(new_pad, dtype=jnp.int32)
    keep_old = (disc_flat > thresh) & (iota_old < n_old)
    keep_new = (new_w_pad > thresh) & (iota_new < n_new)

    # stable stream-compaction positions (old entries first, then new)
    pos_old = jnp.cumsum(keep_old.astype(jnp.int32)) - 1
    kept_old = jnp.sum(keep_old.astype(jnp.int32))
    pos_new = kept_old + jnp.cumsum(keep_new.astype(jnp.int32)) - 1
    new_count = kept_old + jnp.sum(keep_new.astype(jnp.int32))

    dst_old = jnp.where(keep_old, pos_old, new_cap)       # OOB -> dropped
    dst_new = jnp.where(keep_new, pos_new, new_cap)

    w_out = jnp.zeros((new_cap,), jnp.float32)
    w_out = w_out.at[dst_old].set(disc_flat, mode="drop")
    w_out = w_out.at[dst_new].set(new_w_pad, mode="drop")

    idx_out = jnp.zeros((new_cap, 2), jnp.int32)
    idx_out = idx_out.at[dst_old].set(idx_dev.T, mode="drop")
    idx_out = idx_out.at[dst_new].set(new_idx_pad.T, mode="drop")

    return (w_out.reshape(new_cap // LANES, LANES),
            idx_out.T,
            new_count)


class RecurrentGNNPallas:
    """JAX/Pallas port of the RecurrentGNN recurrent edge bookkeeping.

    H_edge_weight / H_edge_index live on device inside power-of-two capacity
    buffers; only the live entry count is synced to host each update.
    """

    def __init__(self, discount: float, debug: bool, correction: bool):
        assert 0 < discount < 1
        self.discount = float(discount)
        self.correction = bool(correction)
        self.debug = debug
        self.embedding_progression = []
        self.store = True
        self.last_match_training = False
        self._w_dev = None        # f32 (cap//128, 128) device buffer
        self._idx_dev = None      # int32 (2, cap) device buffer
        self._count = None        # python int: live entries

    # -- exposed state (host views sliced to the live count) ----------------
    @property
    def H_edge_weight(self):
        if self._count is None:
            return None
        return np.asarray(self._w_dev).reshape(-1)[: self._count]

    @property
    def H_edge_index(self):
        if self._count is None:
            return None
        return np.asarray(self._idx_dev)[:, : self._count]

    # -- helpers -------------------------------------------------------------
    @staticmethod
    def _pad_new(new_w, new_idx):
        n_new = new_w.shape[0]
        pad = _bucket_pad(n_new)
        w = np.zeros((pad,), np.float32)
        w[:n_new] = new_w
        idx = np.zeros((2, pad), np.int32)
        idx[:, :n_new] = new_idx
        return jnp.asarray(w), jnp.asarray(idx)

    def _init_state(self, new_w, new_idx):
        n_new = new_w.shape[0]
        cap = _bucket_capacity(n_new)
        w = np.zeros((cap,), np.float32)
        w[:n_new] = new_w
        idx = np.zeros((2, cap), np.int32)
        idx[:, :n_new] = new_idx
        self._w_dev = jnp.asarray(w).reshape(cap // LANES, LANES)
        self._idx_dev = jnp.asarray(idx)
        self._count = int(n_new)

    # -- RecurrentGNN API ----------------------------------------------------
    def _copy_index(self, edge_index, edge_weight, h=None):
        if not self.store:
            return
        if self.debug and h is not None:
            self.embedding_progression.append(np.asarray(h).copy())

        new_idx = np.asarray(edge_index, dtype=np.int32)
        n_new = new_idx.shape[1]
        # Reference indexes new_edge_weight[0]; an empty edge set is invalid.
        assert n_new > 0, "empty incoming edge set"
        if edge_weight is None:
            new_w = np.ones((n_new,), dtype=np.float32)
        else:
            new_w = np.asarray(edge_weight, dtype=np.float32)

        if self._count is None:
            self._init_state(new_w, new_idx)
            return

        n_old = self._count
        new_cap = _bucket_capacity(n_old + n_new)
        new_w_pad, new_idx_pad = self._pad_new(new_w, new_idx)

        w_out, idx_out, count = _update_step(
            self._w_dev, self._idx_dev, new_w_pad, new_idx_pad,
            n_old, n_new,
            new_cap=new_cap, discount=self.discount,
            correction=self.correction)

        self._w_dev = w_out
        self._idx_dev = idx_out
        self._count = int(count)          # single int32 sync per step

    def reset_index(self):
        self._w_dev = None
        self._idx_dev = None
        self._count = None

    def store_index(self, store: bool):
        self.store = store
        if store and self._count is not None:
            # drop last two entries; stale capacity slots are masked by the
            # kernel's live-index check on the next update.
            self._count = max(self._count - 2, 0)
        if not store:
            self.last_match_training = True

    # forward() is abstract in the PyTorch module (subclasses define the GNN);
    # the recurrent state update above is the module-level compute.
    # TODO(synk): the dynamic-shape boolean compaction itself has no Pallas
    # equivalent; it is done on device with jnp cumsum + scatter-with-drop.


if __name__ == "__main__":
    key = jax.random.PRNGKey(0)
    k1, k2, k3 = jax.random.split(key, 3)

    model = RecurrentGNNPallas(discount=0.9, debug=False, correction=True)

    n_nodes = 16
    n_edges = 8  # edges added per "match"

    # step 1: initial edges with explicit weights
    ei1 = jax.random.randint(k1, (2, n_edges), 0, n_nodes, dtype=jnp.int32)
    ew1 = jax.random.uniform(k2, (n_edges,), dtype=jnp.float32) + 0.5
    model._copy_index(ei1, ew1)

    # step 2: new edges, edge_weight=None -> ones (exercises the Pallas kernel)
    ei2 = jax.random.randint(k3, (2, n_edges), 0, n_nodes, dtype=jnp.int32)
    model._copy_index(ei2, None)

    # step 3: another update with explicit weights
    ew3 = jax.random.uniform(jax.random.PRNGKey(42), (n_edges,),
                             dtype=jnp.float32) * 2.0 + 0.1
    model._copy_index(ei1, ew3)

    assert model.H_edge_weight is not None
    assert model.H_edge_index.shape[0] == 2
    assert model.H_edge_index.shape[1] == model.H_edge_weight.shape[0]

    # NumPy reference for the same sequence of updates
    def ref_update(hw, hi, ei, ew, discount, correction):
        ei = np.asarray(ei, dtype=np.int32)
        new_w = (np.ones(ei.shape[1], dtype=np.float32)
                 if ew is None else np.asarray(ew, dtype=np.float32))
        if hw is None:
            return new_w, ei.copy()
        hw = hw * discount
        if correction:
            hw[-2:] = np.abs(hw[-2:])
        hw = np.concatenate([hw, new_w])
        hi = np.concatenate([hi, ei], axis=1)
        keep = hw > new_w[0] * 1e-14
        return hw[keep], hi[:, keep]

    hw_ref, hi_ref = None, None
    for (ei, ew) in [(ei1, ew1), (ei2, None), (ei1, ew3)]:
        hw_ref, hi_ref = ref_update(hw_ref, hi_ref, ei, ew, 0.9, True)

    np.testing.assert_allclose(model.H_edge_weight, hw_ref, rtol=1e-6, atol=1e-6)
    np.testing.assert_array_equal(model.H_edge_index, hi_ref)

    jax.block_until_ready((model._w_dev, model._idx_dev))
    print("KERNEL_OK")
</pallas_src>

<mosaic_0001>
module attributes {stable_mosaic.version = 11 : i64} {
  func.func @_discount_kernel(%arg0: i32, %arg1: memref<1xi32, #tpu.memory_space<smem>>, %arg2: memref<8x128xf32, #tpu.memory_space<vmem>>, %arg3: memref<8x128xf32, #tpu.memory_space<vmem>>) attributes {dimension_semantics = [#tpu.dimension_semantics<parallel>], iteration_bounds = array<i64: 1>, scalar_prefetch = 1 : i64, scratch_operands = 0 : i64, tpu.core_type = #tpu.core_type<tc>, window_params = [{transform_indices = @transform_0, window_bounds = array<i64: 8, 128>}, {transform_indices = @transform_1, window_bounds = array<i64: 8, 128>}]} {
    %c0 = arith.constant 0 : index
    %0 = memref.load %arg1[%c0] : memref<1xi32, #tpu.memory_space<smem>>
    %c1024_i32 = arith.constant 1024 : i32
    %1 = arith.muli %arg0, %c1024_i32 : i32
    %2 = tpu.iota {dimensions = array<i32: 0>} : vector<8x128xi32>
    %3 = tpu.iota {dimensions = array<i32: 1>} : vector<8x128xi32>
    %c128_i32 = arith.constant 128 : i32
    %4 = vector.broadcast %c128_i32 : i32 to vector<8x128xi32>
    %5 = arith.muli %2, %4 : vector<8x128xi32>
    %6 = vector.broadcast %1 : i32 to vector<8x128xi32>
    %7 = arith.addi %6, %5 : vector<8x128xi32>
    %8 = arith.addi %7, %3 : vector<8x128xi32>
    %c0_0 = arith.constant 0 : index
    %c0_1 = arith.constant 0 : index
    %9 = vector.load %arg2[%c0_0, %c0_1] : memref<8x128xf32, #tpu.memory_space<vmem>>, vector<8x128xf32>
    %cst = arith.constant 0.899999976 : f32
    %10 = vector.broadcast %cst : f32 to vector<8x128xf32>
    %11 = arith.mulf %9, %10 : vector<8x128xf32>
    %c1_i32 = arith.constant 1 : i32
    %12 = arith.subi %0, %c1_i32 : i32
    %13 = vector.broadcast %12 : i32 to vector<8x128xi32>
    %14 = arith.cmpi eq, %8, %13 : vector<8x128xi32>
    %c2_i32 = arith.constant 2 : i32
    %15 = arith.subi %0, %c2_i32 : i32
    %16 = vector.broadcast %15 : i32 to vector<8x128xi32>
    %17 = arith.cmpi eq, %8, %16 : vector<8x128xi32>
    %18 = arith.ori %14, %17 : vector<8x128xi1>
    %19 = math.absf %11 : vector<8x128xf32>
    %20 = arith.select %18, %19, %11 : vector<8x128xi1>, vector<8x128xf32>
    %21 = vector.broadcast %0 : i32 to vector<8x128xi32>
    %22 = arith.cmpi slt, %8, %21 : vector<8x128xi32>
    %cst_2 = arith.constant 0.000000e+00 : f32
    %23 = vector.broadcast %cst_2 : f32 to vector<8x128xf32>
    %24 = arith.select %22, %20, %23 : vector<8x128xi1>, vector<8x128xf32>
    %c0_3 = arith.constant 0 : index
    %c0_4 = arith.constant 0 : index
    %25 = vector.load %arg3[%c0_3, %c0_4] : memref<8x128xf32, #tpu.memory_space<vmem>>, vector<8x128xf32>
    tpu.vector_store %arg3[%c0_3, %c0_4], %24 {strides = array<i32>} : memref<8x128xf32, #tpu.memory_space<vmem>>, vector<8x128xf32>,
    return
  }
  func.func @transform_0(%arg0: i32, %arg1: memref<1xi32, #tpu.memory_space<smem>>) -> (i32, i32) {
    %c0_i32 = arith.constant 0 : i32
    %c0_i32_0 = arith.constant 0 : i32
    return %arg0, %c0_i32 : i32, i32
  }
  func.func @transform_1(%arg0: i32, %arg1: memref<1xi32, #tpu.memory_space<smem>>) -> (i32, i32) {
    %c0_i32 = arith.constant 0 : i32
    %c0_i32_0 = arith.constant 0 : i32
    return %arg0, %c0_i32 : i32, i32
  }
}

</mosaic_0001>

<llo_original>
// kernel: _update_step.1
$region0: #{_update_step.1}
  #allocation0 [shape = 'u32[]', space=smem, size = 0x4, offset = 0x4, fixed_abs, tag = 'smem constant byte address 0x4 - core index']
  #allocation1 [shape = 'u32[144,128]{1,0:T(1,128)}', space=vmem, size = 0x12000, scoped, tag = 'internal scratch']
  #allocation2 [shape = 's32[1]{0}', space=sflag, size = 0x4, scoped, tag = 'scoped memory for _update_step.1']
  #allocation3 [shape = 's32[1]{0:T(128)S(6)}', space=smem, size = 0x200, scoped, tag = 'prefetched SMEM operand 0']
  %s0 = inlined_call_operand.<no memory space> [shape: s32[1], index: 0, kind: input, shape index: {}]
  %s1 = inlined_call_operand.vmem [shape: f32[8,128], index: 1, kind: input, shape index: {}]
  %s2 = inlined_call_operand.vmem [shape: f32[8,128], index: 2, kind: output, shape index: {}]
  %s3 = sld [smem:[#allocation0]]
  $region14: #{_update_step.1} parent=0
    _
  %s5 = ssub.s32 1, %s3
  %s6 = scalar_select 0, %s5, %s3
  %7 = sst [smem:[#allocation3]] %s0
  // Predicated region
  $region2: #{_update_step.1} parent=0 // pred_check
    _
  $region3: #{_update_step.1} parent=0 // pred_check_branch
    %9 = sbr.rel (0) target = $region5
  $region4: #{_update_step.1} parent=0 // pred_region
    _
  $region5: #{_update_step.1} parent=0 // pred_fallthru
    _
  %s10 = sld [smem:[#allocation3]]
  %s11 = smul.u32 0, 1024
  %v12 = vlaneseq
  %v13 = vshrl.u32 %v12, 7
  %v14 = vlaneseq
  %v15 = vand.u32 %v14, 127
  %v16 = vmul.u32 %v13, 128
  %v17 = vstv %s11
  %v18 = vadd.s32 %v17, %v16
  %v19 = vadd.s32 %v18, %v15
  %v20 = vld [vmem:[%s1] sm:$0xff]
  %v21 = vmul.f32 %v20, 0.9
  %s22 = ssub.s32 %s10, 1
  %v23 = vstv %s22
  %vm24 = vcmp.eq.s32.totalorder %v19, %v23
  %s25 = ssub.s32 %s10, 2
  %v26 = vstv %s25
  %vm27 = vcmp.eq.s32.totalorder %v19, %v26
  %vm28 = vmor %vm24, %vm27
  %v29 = vand.u32 2147483647, %v21
  %v30 = vsel %vm28, %v29, %v21
  %v31 = vstv %s10
  %vm32 = vcmp.lt.s32.totalorder %v19, %v31
  %v33 = vsel %vm32, %v30, 0.0
  %34 = vst [vmem:[%s2] sm:$0xff] %v33
  // Predicated region
  $region6: #{_update_step.1} parent=0 // pred_check
    _
  $region7: #{_update_step.1} parent=0 // pred_check_branch
    %36 = sbr.rel (0) target = $region9
  $region8: #{_update_step.1} parent=0 // pred_region
    _
  $region9: #{_update_step.1} parent=0 // pred_fallthru
    _
  // Predicated region
  $region10: #{_update_step.1} parent=0 // pred_check
    _
  $region11: #{_update_step.1} parent=0 // pred_check_branch
    %38 = sbr.rel (0) target = $region13
  $region12: #{_update_step.1} parent=0 // pred_region
    _
  $region13: #{_update_step.1} parent=0 // pred_fallthru
    _

</llo_original>
